<compile_context>
chip_gen: v6e
topology: v6e:2x2x1
jax: 0.10.0
libtpu: 0.0.40
codegen_flags: <defaults>
</compile_context>

<pallas_src>
import numpy as np
import jax
import jax.numpy as jnp
from jax.experimental import pallas as pl
from jax.experimental.pallas import tpu as pltpu

N_COMP = 2
LANES = 128

# Lane layout of the 128-lane work vector inside the kernel:
#   lanes 0..2   : mixing-network hidden (3)
#   lanes 3..5   : mean-level-network hidden (3)
#   lane  6      : constant 1.0 (carries the layer-2 biases)
#   lanes 8..11  : variance-recurrent-network hidden (4)
#   everything else stays 0.


def rmdn_kernel(scal_ref, w1_ref, w2_ref, out_ref):
    # scalar step inputs from SMEM
    x0 = scal_ref[0]
    x1 = scal_ref[1]
    hs0 = scal_ref[2]
    hs1 = scal_ref[3]

    lane = jax.lax.broadcasted_iota(jnp.int32, (1, LANES), 1)

    # ---- fused layer 1 (mixing + mean + variance-partial): pure VPU FMAs ----
    # w1 rows: 0 -> *x0, 1 -> *x1, 2 -> *hs0, 3 -> *hs1, 4 -> *err (added later),
    #          5 -> bias.
    h = (w1_ref[5:6, :]
         + x0 * w1_ref[0:1, :]
         + x1 * w1_ref[1:2, :]
         + hs0 * w1_ref[2:3, :]
         + hs1 * w1_ref[3:4, :])
    # tanh on mixing/mean hidden indices 1,2 (lanes 1,2 and 4,5)
    tanh_mm = (lane == 1) | (lane == 2) | (lane == 4) | (lane == 5)
    h = jnp.where(tanh_mm, jnp.tanh(h), h)
    # constant-1 lane so layer-2 biases ride along in the dot products
    h = jnp.where(lane == 6, 1.0, h)

    def dot_row(vec, r):  # (1,128) · w2[r,:]  ->  (1,1)
        return jnp.sum(vec * w2_ref[r:r + 1, :], axis=-1, keepdims=True)

    # ---- mixing / mean layer 2 (transposed-weight lane reductions) ----
    l0 = dot_row(h, 0)          # eta logit 0 (bias included via lane 6)
    l1 = dot_row(h, 1)          # eta logit 1
    m0 = dot_row(h, 2)          # mu 0
    m1 = dot_row(h, 3)          # mu 1

    # softmax over the two logits, element-wise on (1,1) values
    mx = jnp.maximum(l0, l1)
    e0 = jnp.exp(l0 - mx)
    e1 = jnp.exp(l1 - mx)
    inv = 1.0 / (e0 + e1)
    eta0 = e0 * inv
    eta1 = e1 * inv

    mix_mean = eta0 * m0 + eta1 * m1
    err = (x0 - mix_mean) ** 2                      # (1,1)

    # ---- variance recurrent network ----
    hv = h + err * w1_ref[4:5, :]                   # add err * var_w1[0,:]
    tanh_v = (lane == 9) | (lane == 11)             # var hidden indices 1 and 3
    hv = jnp.where(tanh_v, jnp.tanh(hv), hv)
    s0 = dot_row(hv, 4)
    s1 = dot_row(hv, 5)

    def elu_p1(o):
        # elu(o) + 1 + 1e-15; exp argument clamped so the untaken branch never
        # produces inf.
        return jnp.where(o > 0, o, jnp.exp(jnp.minimum(o, 0.0)) - 1.0) + 1.0 + 1e-15

    sig0 = elu_p1(s0)
    sig1 = elu_p1(s1)

    # ---- pack eta / mu / sigma into one (8,128) tile (rows 0,1,2) ----
    def two_lane(a, b):
        return jnp.where(lane == 0, a, jnp.where(lane == 1, b, 0.0))

    eta_row = two_lane(eta0, eta1)
    mu_row = two_lane(m0, m1)
    sig_row = two_lane(sig0, sig1)

    row = jax.lax.broadcasted_iota(jnp.int32, (8, LANES), 0)
    out_ref[...] = jnp.where(row == 0, eta_row,
                             jnp.where(row == 1, mu_row,
                                       jnp.where(row == 2, sig_row, 0.0)))


# ---------------- parameter construction / one-time packing ----------------

def make_params(key):
    """Deterministic synthetic parameters, stored (in, out). Shapes mirror the
    nn.Linear layers of MixingNetwork / MeanLevelNetwork / VarianceRecurrentNetwork."""
    ks = jax.random.split(key, 12)
    s = 0.4
    return {
        "mix_w1": jax.random.normal(ks[0], (2, 3)) * s, "mix_b1": jax.random.normal(ks[1], (3,)) * s,
        "mix_w2": jax.random.normal(ks[2], (3, N_COMP)) * s, "mix_b2": jax.random.normal(ks[3], (N_COMP,)) * s,
        "mean_w1": jax.random.normal(ks[4], (2, 3)) * s, "mean_b1": jax.random.normal(ks[5], (3,)) * s,
        "mean_w2": jax.random.normal(ks[6], (3, N_COMP)) * s, "mean_b2": jax.random.normal(ks[7], (N_COMP,)) * s,
        "var_w1": jax.random.normal(ks[8], (3, 4)) * s, "var_b1": jax.random.normal(ks[9], (4,)) * s,
        "var_w2": jax.random.normal(ks[10], (4, N_COMP)) * s, "var_b2": jax.random.normal(ks[11], (N_COMP,)) * s,
    }


def pack_params(p):
    """Pack all weights/biases into two (8,128) f32 slabs. Done ONCE, outside
    the per-step forward path."""
    g = lambda k: np.asarray(p[k], np.float32)
    mix_w1, mix_b1, mix_w2, mix_b2 = g("mix_w1"), g("mix_b1"), g("mix_w2"), g("mix_b2")
    mean_w1, mean_b1, mean_w2, mean_b2 = g("mean_w1"), g("mean_b1"), g("mean_w2"), g("mean_b2")
    var_w1, var_b1, var_w2, var_b2 = g("var_w1"), g("var_b1"), g("var_w2"), g("var_b2")

    w1 = np.zeros((8, LANES), np.float32)
    # row r is multiplied by the r-th input scalar; row 5 is the bias row.
    w1[0, 0:3] = mix_w1[0]; w1[0, 3:6] = mean_w1[0]          # * x0
    w1[1, 0:3] = mix_w1[1]; w1[1, 3:6] = mean_w1[1]          # * x1
    w1[2, 8:12] = var_w1[1]                                  # * hs0
    w1[3, 8:12] = var_w1[2]                                  # * hs1
    w1[4, 8:12] = var_w1[0]                                  # * err  (added in-kernel)
    w1[5, 0:3] = mix_b1; w1[5, 3:6] = mean_b1; w1[5, 8:12] = var_b1

    w2 = np.zeros((8, LANES), np.float32)
    # row i is the transposed weight column of output i; lane 6 carries its bias.
    w2[0, 0:3] = mix_w2[:, 0];  w2[0, 6] = mix_b2[0]         # eta logit 0
    w2[1, 0:3] = mix_w2[:, 1];  w2[1, 6] = mix_b2[1]         # eta logit 1
    w2[2, 3:6] = mean_w2[:, 0]; w2[2, 6] = mean_b2[0]        # mu 0
    w2[3, 3:6] = mean_w2[:, 1]; w2[3, 6] = mean_b2[1]        # mu 1
    w2[4, 8:12] = var_w2[:, 0]; w2[4, 6] = var_b2[0]         # sigma pre-act 0
    w2[5, 8:12] = var_w2[:, 1]; w2[5, 6] = var_b2[1]         # sigma pre-act 1

    return jnp.asarray(w1), jnp.asarray(w2)


# ---------------- forward wrapper ----------------

@jax.jit
def rmdn_forward(x, hidden_state, w1_packed, w2_packed):
    """x: (2,) f32, hidden_state: (1, N_COMP) f32 -> (eta, mu, sigma), each (N_COMP,)."""
    scal = jnp.concatenate(
        [x.reshape(-1), hidden_state.reshape(-1)]).astype(jnp.float32)   # (4,) -> SMEM
    out = pl.pallas_call(
        rmdn_kernel,
        out_shape=jax.ShapeDtypeStruct((8, LANES), jnp.float32),
        in_specs=[
            pl.BlockSpec(memory_space=pltpu.MemorySpace.SMEM),   # [x0, x1, hs0, hs1]
            pl.BlockSpec(memory_space=pltpu.MemorySpace.VMEM),   # layer-1 slab
            pl.BlockSpec(memory_space=pltpu.MemorySpace.VMEM),   # layer-2 slab
        ],
        out_specs=pl.BlockSpec(memory_space=pltpu.MemorySpace.VMEM),
    )(scal, w1_packed, w2_packed)
    return out[0, :N_COMP], out[1, :N_COMP], out[2, :N_COMP]


# ---------------- pure-JAX reference (for correctness check) ----------------

def rmdn_ref(x, hidden_state, p):
    def small_net(v, w1, b1, w2, b2):
        h = v @ w1 + b1
        h = jnp.concatenate([h[:1], jnp.tanh(h[1:])])
        return h @ w2 + b2

    o_mix = small_net(x, p["mix_w1"], p["mix_b1"], p["mix_w2"], p["mix_b2"])
    eta = jax.nn.softmax(o_mix, axis=0)
    mu = small_net(x, p["mean_w1"], p["mean_b1"], p["mean_w2"], p["mean_b2"])
    err = (x[0] - jnp.dot(eta, mu)) ** 2
    z = jnp.concatenate([err[None], hidden_state.reshape(-1)])
    hv = z @ p["var_w1"] + p["var_b1"]
    hv = jnp.concatenate([hv[:1], jnp.tanh(hv[1:2]), hv[2:3], jnp.tanh(hv[3:])])
    ov = hv @ p["var_w2"] + p["var_b2"]
    sigma = jax.nn.elu(ov) + 1.0 + 1e-15
    return eta, mu, sigma


if __name__ == "__main__":
    key = jax.random.PRNGKey(0)
    k_par, k_x, k_data = jax.random.split(key, 3)

    params = make_params(k_par)
    w1_packed, w2_packed = pack_params(params)   # one-time packing, hoisted out of the step path

    x = jax.random.normal(k_x, (2,), jnp.float32)                      # module input
    data = jax.random.normal(k_data, (8,), jnp.float32)
    hidden_state = jnp.full((1, N_COMP), jnp.var(data), jnp.float32)   # init_hidden(data)

    eta, mu, sigma = rmdn_forward(x, hidden_state, w1_packed, w2_packed)
    jax.block_until_ready((eta, mu, sigma))

    eta_r, mu_r, sigma_r = rmdn_ref(x, hidden_state, params)
    np.testing.assert_allclose(np.asarray(eta), np.asarray(eta_r), rtol=1e-5, atol=1e-5)
    np.testing.assert_allclose(np.asarray(mu), np.asarray(mu_r), rtol=1e-5, atol=1e-5)
    np.testing.assert_allclose(np.asarray(sigma), np.asarray(sigma_r), rtol=1e-5, atol=1e-5)

    print("KERNEL_OK")
</pallas_src>

<mosaic_0001>
module attributes {stable_mosaic.version = 11 : i64} {
  func.func @rmdn_kernel(%arg0: memref<4xf32, #tpu.memory_space<smem>>, %arg1: memref<8x128xf32, #tpu.memory_space<vmem>>, %arg2: memref<8x128xf32, #tpu.memory_space<vmem>>, %arg3: memref<8x128xf32, #tpu.memory_space<vmem>>) attributes {dimension_semantics = [], scalar_prefetch = 0 : i64, scratch_operands = 0 : i64, tpu.core_type = #tpu.core_type<tc>} {
    %c0 = arith.constant 0 : index
    %0 = memref.load %arg0[%c0] : memref<4xf32, #tpu.memory_space<smem>>
    %c1 = arith.constant 1 : index
    %1 = memref.load %arg0[%c1] : memref<4xf32, #tpu.memory_space<smem>>
    %c2 = arith.constant 2 : index
    %2 = memref.load %arg0[%c2] : memref<4xf32, #tpu.memory_space<smem>>
    %c3 = arith.constant 3 : index
    %3 = memref.load %arg0[%c3] : memref<4xf32, #tpu.memory_space<smem>>
    %4 = tpu.iota {dimensions = array<i32: 1>} : vector<1x128xi32>
    %c5 = arith.constant 5 : index
    %c0_0 = arith.constant 0 : index
    %5 = vector.load %arg1[%c5, %c0_0] : memref<8x128xf32, #tpu.memory_space<vmem>>, vector<1x128xf32>
    %c0_1 = arith.constant 0 : index
    %c0_2 = arith.constant 0 : index
    %6 = vector.load %arg1[%c0_1, %c0_2] : memref<8x128xf32, #tpu.memory_space<vmem>>, vector<1x128xf32>
    %7 = vector.broadcast %0 : f32 to vector<1x128xf32>
    %8 = arith.mulf %7, %6 : vector<1x128xf32>
    %9 = arith.addf %5, %8 : vector<1x128xf32>
    %c1_3 = arith.constant 1 : index
    %c0_4 = arith.constant 0 : index
    %10 = vector.load %arg1[%c1_3, %c0_4] : memref<8x128xf32, #tpu.memory_space<vmem>>, vector<1x128xf32>
    %11 = vector.broadcast %1 : f32 to vector<1x128xf32>
    %12 = arith.mulf %11, %10 : vector<1x128xf32>
    %13 = arith.addf %9, %12 : vector<1x128xf32>
    %c2_5 = arith.constant 2 : index
    %c0_6 = arith.constant 0 : index
    %14 = vector.load %arg1[%c2_5, %c0_6] : memref<8x128xf32, #tpu.memory_space<vmem>>, vector<1x128xf32>
    %15 = vector.broadcast %2 : f32 to vector<1x128xf32>
    %16 = arith.mulf %15, %14 : vector<1x128xf32>
    %17 = arith.addf %13, %16 : vector<1x128xf32>
    %c3_7 = arith.constant 3 : index
    %c0_8 = arith.constant 0 : index
    %18 = vector.load %arg1[%c3_7, %c0_8] : memref<8x128xf32, #tpu.memory_space<vmem>>, vector<1x128xf32>
    %19 = vector.broadcast %3 : f32 to vector<1x128xf32>
    %20 = arith.mulf %19, %18 : vector<1x128xf32>
    %21 = arith.addf %17, %20 : vector<1x128xf32>
    %c1_i32 = arith.constant 1 : i32
    %22 = vector.broadcast %c1_i32 : i32 to vector<1x128xi32>
    %23 = arith.cmpi eq, %4, %22 : vector<1x128xi32>
    %c2_i32 = arith.constant 2 : i32
    %24 = vector.broadcast %c2_i32 : i32 to vector<1x128xi32>
    %25 = arith.cmpi eq, %4, %24 : vector<1x128xi32>
    %26 = arith.ori %23, %25 : vector<1x128xi1>
    %c4_i32 = arith.constant 4 : i32
    %27 = vector.broadcast %c4_i32 : i32 to vector<1x128xi32>
    %28 = arith.cmpi eq, %4, %27 : vector<1x128xi32>
    %29 = arith.ori %26, %28 : vector<1x128xi1>
    %c5_i32 = arith.constant 5 : i32
    %30 = vector.broadcast %c5_i32 : i32 to vector<1x128xi32>
    %31 = arith.cmpi eq, %4, %30 : vector<1x128xi32>
    %32 = arith.ori %29, %31 : vector<1x128xi1>
    %33 = math.tanh %21 : vector<1x128xf32>
    %34 = arith.select %32, %33, %21 : vector<1x128xi1>, vector<1x128xf32>
    %c6_i32 = arith.constant 6 : i32
    %35 = vector.broadcast %c6_i32 : i32 to vector<1x128xi32>
    %36 = arith.cmpi eq, %4, %35 : vector<1x128xi32>
    %cst = arith.constant 1.000000e+00 : f32
    %37 = vector.broadcast %cst : f32 to vector<1x128xf32>
    %38 = arith.select %36, %37, %34 : vector<1x128xi1>, vector<1x128xf32>
    %c0_9 = arith.constant 0 : index
    %c0_10 = arith.constant 0 : index
    %39 = vector.load %arg2[%c0_9, %c0_10] : memref<8x128xf32, #tpu.memory_space<vmem>>, vector<1x128xf32>
    %40 = arith.mulf %38, %39 : vector<1x128xf32>
    %cst_11 = arith.constant dense<0.000000e+00> : vector<1xf32>
    %41 = vector.multi_reduction <add>, %40, %cst_11 [1] : vector<1x128xf32> to vector<1xf32>
    %42 = vector.shape_cast %41 : vector<1xf32> to vector<1x1xf32>
    %c1_12 = arith.constant 1 : index
    %c0_13 = arith.constant 0 : index
    %43 = vector.load %arg2[%c1_12, %c0_13] : memref<8x128xf32, #tpu.memory_space<vmem>>, vector<1x128xf32>
    %44 = arith.mulf %38, %43 : vector<1x128xf32>
    %cst_14 = arith.constant dense<0.000000e+00> : vector<1xf32>
    %45 = vector.multi_reduction <add>, %44, %cst_14 [1] : vector<1x128xf32> to vector<1xf32>
    %46 = vector.shape_cast %45 : vector<1xf32> to vector<1x1xf32>
    %c2_15 = arith.constant 2 : index
    %c0_16 = arith.constant 0 : index
    %47 = vector.load %arg2[%c2_15, %c0_16] : memref<8x128xf32, #tpu.memory_space<vmem>>, vector<1x128xf32>
    %48 = arith.mulf %38, %47 : vector<1x128xf32>
    %cst_17 = arith.constant dense<0.000000e+00> : vector<1xf32>
    %49 = vector.multi_reduction <add>, %48, %cst_17 [1] : vector<1x128xf32> to vector<1xf32>
    %50 = vector.shape_cast %49 : vector<1xf32> to vector<1x1xf32>
    %c3_18 = arith.constant 3 : index
    %c0_19 = arith.constant 0 : index
    %51 = vector.load %arg2[%c3_18, %c0_19] : memref<8x128xf32, #tpu.memory_space<vmem>>, vector<1x128xf32>
    %52 = arith.mulf %38, %51 : vector<1x128xf32>
    %cst_20 = arith.constant dense<0.000000e+00> : vector<1xf32>
    %53 = vector.multi_reduction <add>, %52, %cst_20 [1] : vector<1x128xf32> to vector<1xf32>
    %54 = vector.shape_cast %53 : vector<1xf32> to vector<1x1xf32>
    %55 = arith.maximumf %42, %46 : vector<1x1xf32>
    %56 = arith.subf %42, %55 : vector<1x1xf32>
    %57 = math.exp %56 : vector<1x1xf32>
    %58 = arith.subf %46, %55 : vector<1x1xf32>
    %59 = math.exp %58 : vector<1x1xf32>
    %60 = arith.addf %57, %59 : vector<1x1xf32>
    %cst_21 = arith.constant 1.000000e+00 : f32
    %61 = vector.broadcast %cst_21 : f32 to vector<1x1xf32>
    %62 = arith.divf %61, %60 : vector<1x1xf32>
    %63 = arith.mulf %57, %62 : vector<1x1xf32>
    %64 = arith.mulf %59, %62 : vector<1x1xf32>
    %65 = arith.mulf %63, %50 : vector<1x1xf32>
    %66 = arith.mulf %64, %54 : vector<1x1xf32>
    %67 = arith.addf %65, %66 : vector<1x1xf32>
    %68 = vector.broadcast %0 : f32 to vector<1x1xf32>
    %69 = arith.subf %68, %67 : vector<1x1xf32>
    %70 = arith.mulf %69, %69 : vector<1x1xf32>
    %c4 = arith.constant 4 : index
    %c0_22 = arith.constant 0 : index
    %71 = vector.load %arg1[%c4, %c0_22] : memref<8x128xf32, #tpu.memory_space<vmem>>, vector<1x128xf32>
    %72 = vector.broadcast %70 : vector<1x1xf32> to vector<1x128xf32>
    %73 = arith.mulf %72, %71 : vector<1x128xf32>
    %74 = arith.addf %38, %73 : vector<1x128xf32>
    %c9_i32 = arith.constant 9 : i32
    %75 = vector.broadcast %c9_i32 : i32 to vector<1x128xi32>
    %76 = arith.cmpi eq, %4, %75 : vector<1x128xi32>
    %c11_i32 = arith.constant 11 : i32
    %77 = vector.broadcast %c11_i32 : i32 to vector<1x128xi32>
    %78 = arith.cmpi eq, %4, %77 : vector<1x128xi32>
    %79 = arith.ori %76, %78 : vector<1x128xi1>
    %80 = math.tanh %74 : vector<1x128xf32>
    %81 = arith.select %79, %80, %74 : vector<1x128xi1>, vector<1x128xf32>
    %c4_23 = arith.constant 4 : index
    %c0_24 = arith.constant 0 : index
    %82 = vector.load %arg2[%c4_23, %c0_24] : memref<8x128xf32, #tpu.memory_space<vmem>>, vector<1x128xf32>
    %83 = arith.mulf %81, %82 : vector<1x128xf32>
    %cst_25 = arith.constant dense<0.000000e+00> : vector<1xf32>
    %84 = vector.multi_reduction <add>, %83, %cst_25 [1] : vector<1x128xf32> to vector<1xf32>
    %85 = vector.shape_cast %84 : vector<1xf32> to vector<1x1xf32>
    %c5_26 = arith.constant 5 : index
    %c0_27 = arith.constant 0 : index
    %86 = vector.load %arg2[%c5_26, %c0_27] : memref<8x128xf32, #tpu.memory_space<vmem>>, vector<1x128xf32>
    %87 = arith.mulf %81, %86 : vector<1x128xf32>
    %cst_28 = arith.constant dense<0.000000e+00> : vector<1xf32>
    %88 = vector.multi_reduction <add>, %87, %cst_28 [1] : vector<1x128xf32> to vector<1xf32>
    %89 = vector.shape_cast %88 : vector<1xf32> to vector<1x1xf32>
    %cst_29 = arith.constant 0.000000e+00 : f32
    %90 = vector.broadcast %cst_29 : f32 to vector<1x1xf32>
    %91 = arith.cmpf ogt, %85, %90 : vector<1x1xf32>
    %cst_30 = arith.constant 0.000000e+00 : f32
    %92 = vector.broadcast %cst_30 : f32 to vector<1x1xf32>
    %93 = arith.minimumf %85, %92 : vector<1x1xf32>
    %94 = math.exp %93 : vector<1x1xf32>
    %cst_31 = arith.constant 1.000000e+00 : f32
    %95 = vector.broadcast %cst_31 : f32 to vector<1x1xf32>
    %96 = arith.subf %94, %95 : vector<1x1xf32>
    %97 = arith.select %91, %85, %96 : vector<1x1xi1>, vector<1x1xf32>
    %cst_32 = arith.constant 1.000000e+00 : f32
    %98 = vector.broadcast %cst_32 : f32 to vector<1x1xf32>
    %99 = arith.addf %97, %98 : vector<1x1xf32>
    %cst_33 = arith.constant 1.000000e-15 : f32
    %100 = vector.broadcast %cst_33 : f32 to vector<1x1xf32>
    %101 = arith.addf %99, %100 : vector<1x1xf32>
    %cst_34 = arith.constant 0.000000e+00 : f32
    %102 = vector.broadcast %cst_34 : f32 to vector<1x1xf32>
    %103 = arith.cmpf ogt, %89, %102 : vector<1x1xf32>
    %cst_35 = arith.constant 0.000000e+00 : f32
    %104 = vector.broadcast %cst_35 : f32 to vector<1x1xf32>
    %105 = arith.minimumf %89, %104 : vector<1x1xf32>
    %106 = math.exp %105 : vector<1x1xf32>
    %cst_36 = arith.constant 1.000000e+00 : f32
    %107 = vector.broadcast %cst_36 : f32 to vector<1x1xf32>
    %108 = arith.subf %106, %107 : vector<1x1xf32>
    %109 = arith.select %103, %89, %108 : vector<1x1xi1>, vector<1x1xf32>
    %cst_37 = arith.constant 1.000000e+00 : f32
    %110 = vector.broadcast %cst_37 : f32 to vector<1x1xf32>
    %111 = arith.addf %109, %110 : vector<1x1xf32>
    %cst_38 = arith.constant 1.000000e-15 : f32
    %112 = vector.broadcast %cst_38 : f32 to vector<1x1xf32>
    %113 = arith.addf %111, %112 : vector<1x1xf32>
    %c0_i32 = arith.constant 0 : i32
    %114 = vector.broadcast %c0_i32 : i32 to vector<1x128xi32>
    %115 = arith.cmpi eq, %4, %114 : vector<1x128xi32>
    %c1_i32_39 = arith.constant 1 : i32
    %116 = vector.broadcast %c1_i32_39 : i32 to vector<1x128xi32>
    %117 = arith.cmpi eq, %4, %116 : vector<1x128xi32>
    %cst_40 = arith.constant 0.000000e+00 : f32
    %118 = vector.shape_cast %64 : vector<1x1xf32> to vector<1x1xf32>
    %119 = vector.broadcast %118 : vector<1x1xf32> to vector<1x128xf32>
    %120 = vector.broadcast %cst_40 : f32 to vector<1x128xf32>
    %121 = arith.select %117, %119, %120 : vector<1x128xi1>, vector<1x128xf32>
    %122 = vector.shape_cast %63 : vector<1x1xf32> to vector<1x1xf32>
    %123 = vector.broadcast %122 : vector<1x1xf32> to vector<1x128xf32>
    %124 = arith.select %115, %123, %121 : vector<1x128xi1>, vector<1x128xf32>
    %c0_i32_41 = arith.constant 0 : i32
    %125 = vector.broadcast %c0_i32_41 : i32 to vector<1x128xi32>
    %126 = arith.cmpi eq, %4, %125 : vector<1x128xi32>
    %c1_i32_42 = arith.constant 1 : i32
    %127 = vector.broadcast %c1_i32_42 : i32 to vector<1x128xi32>
    %128 = arith.cmpi eq, %4, %127 : vector<1x128xi32>
    %cst_43 = arith.constant 0.000000e+00 : f32
    %129 = vector.shape_cast %54 : vector<1x1xf32> to vector<1x1xf32>
    %130 = vector.broadcast %129 : vector<1x1xf32> to vector<1x128xf32>
    %131 = vector.broadcast %cst_43 : f32 to vector<1x128xf32>
    %132 = arith.select %128, %130, %131 : vector<1x128xi1>, vector<1x128xf32>
    %133 = vector.shape_cast %50 : vector<1x1xf32> to vector<1x1xf32>
    %134 = vector.broadcast %133 : vector<1x1xf32> to vector<1x128xf32>
    %135 = arith.select %126, %134, %132 : vector<1x128xi1>, vector<1x128xf32>
    %c0_i32_44 = arith.constant 0 : i32
    %136 = vector.broadcast %c0_i32_44 : i32 to vector<1x128xi32>
    %137 = arith.cmpi eq, %4, %136 : vector<1x128xi32>
    %c1_i32_45 = arith.constant 1 : i32
    %138 = vector.broadcast %c1_i32_45 : i32 to vector<1x128xi32>
    %139 = arith.cmpi eq, %4, %138 : vector<1x128xi32>
    %cst_46 = arith.constant 0.000000e+00 : f32
    %140 = vector.shape_cast %113 : vector<1x1xf32> to vector<1x1xf32>
    %141 = vector.broadcast %140 : vector<1x1xf32> to vector<1x128xf32>
    %142 = vector.broadcast %cst_46 : f32 to vector<1x128xf32>
    %143 = arith.select %139, %141, %142 : vector<1x128xi1>, vector<1x128xf32>
    %144 = vector.shape_cast %101 : vector<1x1xf32> to vector<1x1xf32>
    %145 = vector.broadcast %144 : vector<1x1xf32> to vector<1x128xf32>
    %146 = arith.select %137, %145, %143 : vector<1x128xi1>, vector<1x128xf32>
    %147 = tpu.iota {dimensions = array<i32: 0>} : vector<8x128xi32>
    %c0_i32_47 = arith.constant 0 : i32
    %148 = vector.broadcast %c0_i32_47 : i32 to vector<8x128xi32>
    %149 = arith.cmpi eq, %147, %148 : vector<8x128xi32>
    %c1_i32_48 = arith.constant 1 : i32
    %150 = vector.broadcast %c1_i32_48 : i32 to vector<8x128xi32>
    %151 = arith.cmpi eq, %147, %150 : vector<8x128xi32>
    %c2_i32_49 = arith.constant 2 : i32
    %152 = vector.broadcast %c2_i32_49 : i32 to vector<8x128xi32>
    %153 = arith.cmpi eq, %147, %152 : vector<8x128xi32>
    %cst_50 = arith.constant 0.000000e+00 : f32
    %154 = vector.shape_cast %146 : vector<1x128xf32> to vector<1x128xf32>
    %155 = vector.broadcast %154 : vector<1x128xf32> to vector<8x128xf32>
    %156 = vector.broadcast %cst_50 : f32 to vector<8x128xf32>
    %157 = arith.select %153, %155, %156 : vector<8x128xi1>, vector<8x128xf32>
    %158 = vector.shape_cast %135 : vector<1x128xf32> to vector<1x128xf32>
    %159 = vector.broadcast %158 : vector<1x128xf32> to vector<8x128xf32>
    %160 = arith.select %151, %159, %157 : vector<8x128xi1>, vector<8x128xf32>
    %161 = vector.shape_cast %124 : vector<1x128xf32> to vector<1x128xf32>
    %162 = vector.broadcast %161 : vector<1x128xf32> to vector<8x128xf32>
    %163 = arith.select %149, %162, %160 : vector<8x128xi1>, vector<8x128xf32>
    %c0_51 = arith.constant 0 : index
    %c0_52 = arith.constant 0 : index
    %164 = vector.load %arg3[%c0_51, %c0_52] : memref<8x128xf32, #tpu.memory_space<vmem>>, vector<8x128xf32>
    tpu.vector_store %arg3[%c0_51, %c0_52], %163 {strides = array<i32>} : memref<8x128xf32, #tpu.memory_space<vmem>>, vector<8x128xf32>,
    return
  }
}

</mosaic_0001>

<llo_original>
// kernel: rmdn_forward.1
$region0: #{rmdn_forward.1}
  #allocation0 [shape = 'u32[]', space=smem, size = 0x4, offset = 0x4, fixed_abs, tag = 'smem constant byte address 0x4 - core index']
  #allocation1 [shape = 'u32[144,128]{1,0:T(1,128)}', space=vmem, size = 0x12000, scoped, tag = 'internal scratch']
  %s0 = inlined_call_operand.vmem [shape: f32[4], index: 0, kind: input, shape index: {}]
  %s1 = inlined_call_operand.vmem [shape: f32[8,128], index: 1, kind: input, shape index: {}]
  %s2 = inlined_call_operand.hbm [shape: f32[8,128], index: 2, kind: input, shape index: {}]
  %s3 = inlined_call_operand.vmem [shape: f32[8,128], index: 3, kind: output, shape index: {}]
  %s4 = sld [smem:[#allocation0]]
  $region30: #{rmdn_forward.1} parent=0
    _
  %s6 = ssub.s32 1, %s4
  %s7 = scalar_select 0, %s6, %s4
  $region1: #{rmdn_forward.1} parent=0
    #allocation2 [shape = 'u8[512]{0}', space=smem, size = 0x200, scoped, tag = 'input window, operand 0, single buffered']
    #allocation3 [shape = 's32[1]{0}', space=sflag, size = 0x4, scoped, tag = 'scoped memory for rmdn_forward.1']
    #allocation4 [shape = 's32[1]{0}', space=sflag, size = 0x4, scoped, tag = 'scoped memory for rmdn_forward.1']
    #allocation5 [shape = 'u8[4096]{0}', space=vmem, size = 0x1000, scoped, tag = 'input window, operand 2, single buffered']
    %8 = vsyncpa [#allocation4], 0
    %9 = vsyncpa [#allocation3], 0
    // Predicated region
    $region2: #{rmdn_forward.1} parent=1 // pred_check
      _
    $region3: #{rmdn_forward.1} parent=1 // pred_check_branch
      %11 = sbr.rel (0) target = $region5
    $region4: #{rmdn_forward.1} parent=1 // pred_region
      %s13 = ssub.s32 16, 16
      %14 = vsyncadd [#allocation4], %s13
      %s16 = sshll.u32 %s0, 4
      %s17 = int_to_ptr.vmem [resolvable:$true] %s16
      %19 = dma.vmem_to_smem %s17, 16, [#allocation2], [#allocation4]
    $region5: #{rmdn_forward.1} parent=1 // pred_fallthru
      _
    // Predicated region
    $region6: #{rmdn_forward.1} parent=1 // pred_check
      _
    $region7: #{rmdn_forward.1} parent=1 // pred_check_branch
      %21 = sbr.rel (0) target = $region9
    $region8: #{rmdn_forward.1} parent=1 // pred_region
      _
    $region9: #{rmdn_forward.1} parent=1 // pred_fallthru
      _
    // Predicated region
    $region10: #{rmdn_forward.1} parent=1 // pred_check
      _
    $region11: #{rmdn_forward.1} parent=1 // pred_check_branch
      %23 = sbr.rel (0) target = $region13
    $region12: #{rmdn_forward.1} parent=1 // pred_region
      %s25 = ssub.s32 128, 128
      %26 = vsyncadd [#allocation3], %s25
      %s28 = sshll.u32 [#allocation5], 4
      %s29 = int_to_ptr.vmem [resolvable:$true] %s28
      %31 = dma.hbm_to_vmem [thread:$0]  %s2, 128, %s29, [#allocation3]
    $region13: #{rmdn_forward.1} parent=1 // pred_fallthru
      _
    // Predicated region
    $region14: #{rmdn_forward.1} parent=1 // pred_check
      _
    $region15: #{rmdn_forward.1} parent=1 // pred_check_branch
      %33 = sbr.rel (0) target = $region17
    $region16: #{rmdn_forward.1} parent=1 // pred_region
      %34 = dma.done [#allocation4], 16
    $region17: #{rmdn_forward.1} parent=1 // pred_fallthru
      _
    // Predicated region
    $region18: #{rmdn_forward.1} parent=1 // pred_check
      _
    $region19: #{rmdn_forward.1} parent=1 // pred_check_branch
      %36 = sbr.rel (0) target = $region21
    $region20: #{rmdn_forward.1} parent=1 // pred_region
      %37 = dma.done [#allocation3], 128
    $region21: #{rmdn_forward.1} parent=1 // pred_fallthru
      _
    %38 = sfence
    %s39 = sld [smem:[#allocation2]]
    %s40 = sld [smem:[#allocation2 + $0x1]]
    %s41 = sld [smem:[#allocation2 + $0x2]]
    %s42 = sld [smem:[#allocation2 + $0x3]]
    %v43 = vlaneseq
    %v44 = vand.u32 %v43, 127
    %v45 = vld [vmem:[%s1 + $0x5] sm:$0x1]
    %v46 = vld [vmem:[%s1] sm:$0x1]
    %v47 = vstv %s39
    %v48 = vmul.f32 %v47, %v46
    %v49 = vadd.f32 %v45, %v48
    %v50 = vld [vmem:[%s1 + $0x1] sm:$0x1]
    %v51 = vstv %s40
    %v52 = vmul.f32 %v51, %v50
    %v53 = vadd.f32 %v49, %v52
    %v54 = vld [vmem:[%s1 + $0x2] sm:$0x1]
    %v55 = vstv %s41
    %v56 = vmul.f32 %v55, %v54
    %v57 = vadd.f32 %v53, %v56
    %v58 = vld [vmem:[%s1 + $0x3] sm:$0x1]
    %v59 = vstv %s42
    %v60 = vmul.f32 %v59, %v58
    %v61 = vadd.f32 %v57, %v60
    %vm62 = vcmp.eq.s32.totalorder %v44, 1
    %vm63 = vcmp.eq.s32.totalorder %v44, 2
    %vm64 = vmor %vm62, %vm63
    %vm65 = vcmp.eq.s32.totalorder %v44, 4
    %vm66 = vmor %vm64, %vm65
    %vm67 = vcmp.eq.s32.totalorder %v44, 5
    %vm68 = vmor %vm66, %vm67
    %v69 = vtanh.pop %v61
    %v70 = vsel %vm68, %v69, %v61
    %vm71 = vcmp.eq.s32.totalorder %v44, 6
    %v72 = vsel %vm71, 1.0, %v70
    %v73 = vld [vmem:[#allocation5] sm:$0x1]
    %v74 = vmul.f32 %v72, %v73
    %vm75 = vcmask 1040384
    %v76 = vsel %vm75, %v74, 0.0
    %77 = vadd.xlane.f32.xlu0 %v76
    %v78 = vpop.xlane.xlu0 %77
    %v79 = vld [vmem:[#allocation5 + $0x1] sm:$0x1]
    %v80 = vmul.f32 %v72, %v79
    %v81 = vsel %vm75, %v80, 0.0
    %82 = vadd.xlane.f32.xlu0 %v81
    %v83 = vpop.xlane.xlu0 %82
    %v84 = vld [vmem:[#allocation5 + $0x2] sm:$0x1]
    %v85 = vmul.f32 %v72, %v84
    %v86 = vsel %vm75, %v85, 0.0
    %87 = vadd.xlane.f32.xlu0 %v86
    %v88 = vpop.xlane.xlu0 %87
    %v89 = vld [vmem:[#allocation5 + $0x3] sm:$0x1]
    %v90 = vmul.f32 %v72, %v89
    %v91 = vsel %vm75, %v90, 0.0
    %92 = vadd.xlane.f32.xlu0 %v91
    %v93 = vpop.xlane.xlu0 %92
    %v94 = vmax.f32 %v78, %v83
    %v95 = vsub.f32 %v78, %v94
    %v96 = vmul.f32 %v95, 1.442695
    %v97 = vpow.pop %v96
    %v98 = vsub.f32 %v83, %v94
    %v99 = vmul.f32 %v98, 1.442695
    %v100 = vpow.pop %v99
    %v101 = vadd.f32 %v97, %v100
    %v102 = vrcp.pop %v101
    %v103 = vmul.f32 1.0, %v102
    %v104 = vmul.f32 %v97, %v103
    %v105 = vmul.f32 %v100, %v103
    %v106 = vmul.f32 %v104, %v88
    %v107 = vmul.f32 %v105, %v93
    %v108 = vadd.f32 %v106, %v107
    %v109 = vsub.f32 %v47, %v108
    %v110 = vmul.f32 %v109, %v109
    %v111 = vld [vmem:[%s1 + $0x4] sm:$0x1]
    %v112 = vmul.f32 %v110, %v111
    %v113 = vadd.f32 %v72, %v112
    %vm114 = vcmp.eq.s32.totalorder %v44, 9
    %vm115 = vcmp.eq.s32.totalorder %v44, 11
    %vm116 = vmor %vm114, %vm115
    %v117 = vtanh.pop %v113
    %v118 = vsel %vm116, %v117, %v113
    %v119 = vld [vmem:[#allocation5 + $0x4] sm:$0x1]
    %v120 = vmul.f32 %v118, %v119
    %v121 = vsel %vm75, %v120, 0.0
    %122 = vadd.xlane.f32.xlu0 %v121
    %v123 = vpop.xlane.xlu0 %122
    %v124 = vld [vmem:[#allocation5 + $0x5] sm:$0x1]
    %v125 = vmul.f32 %v118, %v124
    %v126 = vsel %vm75, %v125, 0.0
    %127 = vadd.xlane.f32.xlu0 %v126
    %v128 = vpop.xlane.xlu0 %127
    %vm129 = vcmp.gt.f32.partialorder %v123, 0.0
    %v130 = vmin.f32 %v123, 0.0
    %v131 = vmul.f32 %v130, 1.442695
    %v132 = vpow.pop %v131
    %v133 = vsub.f32 %v132, 1.0
    %v134 = vsel %vm129, %v123, %v133
    %v135 = vadd.f32 %v134, 1.0
    %v136 = vadd.f32 %v135, 1e-15
    %vm137 = vcmp.gt.f32.partialorder %v128, 0.0
    %v138 = vmin.f32 %v128, 0.0
    %v139 = vmul.f32 %v138, 1.442695
    %v140 = vpow.pop %v139
    %v141 = vsub.f32 %v140, 1.0
    %v142 = vsel %vm137, %v128, %v141
    %v143 = vadd.f32 %v142, 1.0
    %v144 = vadd.f32 %v143, 1e-15
    %vm145 = vcmp.eq.s32.totalorder %v44, 0
    %v146 = vsel %vm62, %v105, 0.0
    %v147 = vsel %vm145, %v104, %v146
    %v148 = vsel %vm62, %v93, 0.0
    %v149 = vsel %vm145, %v88, %v148
    %v150 = vsel %vm62, %v144, 0.0
    %v151 = vsel %vm145, %v136, %v150
    %v152 = vlaneseq
    %v153 = vshrl.u32 %v152, 7
    %vm154 = vcmp.eq.s32.totalorder %v153, 0
    %vm155 = vcmp.eq.s32.totalorder %v153, 1
    %vm156 = vcmp.eq.s32.totalorder %v153, 2
    %v157 = vlaneseq
    %v158 = vshrl.u32 %v157, 7
    %v159 = vsub.s32 0, %v158
    %v160 = vrot.slane %v151, %v159
    %v161 = vsel %vm156, %v160, 0.0
    %v162 = vlaneseq
    %v163 = vshrl.u32 %v162, 7
    %v164 = vsub.s32 0, %v163
    %v165 = vrot.slane %v149, %v164
    %v166 = vsel %vm155, %v165, %v161
    %v167 = vlaneseq
    %v168 = vshrl.u32 %v167, 7
    %v169 = vsub.s32 0, %v168
    %v170 = vrot.slane %v147, %v169
    %v171 = vsel %vm154, %v170, %v166
    %172 = vst [vmem:[%s3] sm:$0xff] %v171
    // Predicated region
    $region22: #{rmdn_forward.1} parent=1 // pred_check
      _
    $region23: #{rmdn_forward.1} parent=1 // pred_check_branch
      %174 = sbr.rel (0) target = $region25
    $region24: #{rmdn_forward.1} parent=1 // pred_region
      _
    $region25: #{rmdn_forward.1} parent=1 // pred_fallthru
      _
    // Predicated region
    $region26: #{rmdn_forward.1} parent=1 // pred_check
      _
    $region27: #{rmdn_forward.1} parent=1 // pred_check_branch
      %176 = sbr.rel (0) target = $region29
    $region28: #{rmdn_forward.1} parent=1 // pred_region
      _
    $region29: #{rmdn_forward.1} parent=1 // pred_fallthru
      _
    %177 = vsyncpa [#allocation3], 1
    %178 = vsyncpa [#allocation4], 1

</llo_original>
